<compile_context>
chip_gen: v7x
topology: tpu7x:2x2x1
jax: 0.10.0
libtpu: 0.0.40
codegen_flags: <defaults>
</compile_context>

<pallas_src>
import functools
import math

import jax
import jax.numpy as jnp
from jax import lax
from jax.experimental import pallas as pl
from jax.experimental.pallas import tpu as pltpu


# ----------------------------- helpers ------------------------------

def _vmem_limit_bytes():
    """Scoped-VMEM budget derived from the chip (v7x: 64 MiB/TC, v5e/v6e: 128 MiB)."""
    try:
        cap = int(pltpu.get_tpu_info().vmem_capacity_bytes)
    except Exception:
        cap = 64 << 20
    return max(32 << 20, int(cap * 0.65))


def fold_bn(gamma, beta, mean, var, eps=1e-5):
    scale = gamma / jnp.sqrt(var + eps)
    bias = beta - mean * scale
    return scale[None, :], bias[None, :]


def _taps_to_matrix(w5):
    """(3,3,G,cin_g,cout_g) -> (9*Cin, Cout) block-diagonal wide-K weight.

    Row ordering is tap-major (tap k = dy*3+dx outer, per-branch input channel
    inner), matching the in-kernel 9-patch concatenation.  The dense block-diag
    form is only used because cin_g << 128 here (MXU tiles would be mostly idle
    either way).
    TODO(synk): per-group matmul path for configs with cin_g >= 128.
    """
    kh, kw, g, cig, cog = w5.shape
    cin, cout = g * cig, g * cog
    wt = jnp.zeros((kh * kw, cin, cout), jnp.float32)
    w_t = w5.reshape(kh * kw, g, cig, cog)
    for gi in range(g):
        wt = wt.at[:, gi * cig:(gi + 1) * cig, gi * cog:(gi + 1) * cog].set(w_t[:, gi])
    return wt.reshape(kh * kw * cin, cout)


def _divisor_tile(m, cap):
    """Largest divisor of m <= cap, preferring multiples of 8."""
    if m <= cap:
        return m
    best = 1
    for d in range(cap, 0, -1):
        if m % d == 0:
            if d % 8 == 0:
                return d
            best = max(best, d)
    return best


def _pick_row_tile(h, w, ctot, itemsize=2):
    """Largest divisor of h whose double-buffered halo window fits the budget."""
    budget = min(8 << 20, _vmem_limit_bytes() // 6)
    best = None
    for tr in range(h, 0, -1):
        if h % tr:
            continue
        if 2 * (tr + 2) * (w + 2) * ctot * itemsize > budget:
            continue
        if (tr * w) % 8 == 0:
            return tr
        if best is None:
            best = tr
    # TODO(synk): masked tail support for row counts without a good divisor.
    return best if best is not None else h


# ----------------------------- 1x1 head conv ------------------------------

def _mm_bn_relu_kernel(x_ref, w_ref, s_ref, b_ref, o_ref):
    # y = relu((x @ w) * scale + bias), stored bf16.
    y = jnp.dot(x_ref[...].astype(jnp.bfloat16), w_ref[...],
                preferred_element_type=jnp.float32)
    y = jnp.maximum(y * s_ref[...] + b_ref[...], 0.0)
    o_ref[...] = y.astype(o_ref.dtype)


def conv1x1_bn_relu(x2d, w_bf16, scale, bias, tm_max=1024):
    m, cin = x2d.shape
    cout = w_bf16.shape[1]
    tm = _divisor_tile(m, tm_max)
    return pl.pallas_call(
        _mm_bn_relu_kernel,
        out_shape=jax.ShapeDtypeStruct((m, cout), jnp.bfloat16),
        grid=(m // tm,),
        in_specs=[
            pl.BlockSpec((tm, cin), lambda i: (i, 0)),
            pl.BlockSpec((cin, cout), lambda i: (0, 0)),
            pl.BlockSpec((1, cout), lambda i: (0, 0)),
            pl.BlockSpec((1, cout), lambda i: (0, 0)),
        ],
        out_specs=pl.BlockSpec((tm, cout), lambda i: (i, 0)),
        compiler_params=pltpu.CompilerParams(
            dimension_semantics=("parallel",),
            vmem_limit_bytes=_vmem_limit_bytes()),
    )(x2d, w_bf16, scale, bias)


# ------------------- grouped 3x3 conv (stride 1, pad 1) -------------------

def _gconv3x3_kernel(*refs, nb, n, h, w, tr, n_tiles, branch_cfg):
    # refs: x_hbm, w[nb], scale[nb], bias[nb], out[nb], xbuf, sem
    x_hbm = refs[0]
    w_refs = refs[1:1 + nb]
    s_refs = refs[1 + nb:1 + 2 * nb]
    b_refs = refs[1 + 2 * nb:1 + 3 * nb]
    o_refs = refs[1 + 3 * nb:1 + 4 * nb]
    xbuf = refs[1 + 4 * nb]          # (2, tr+2, w+2, ctot) bf16
    sem = refs[2 + 4 * nb]           # DMA sems, shape (2, 3)

    wp = w + 2
    ctot = xbuf.shape[-1]
    i = pl.program_id(0)             # batch index
    j = pl.program_id(1)             # output-row tile index
    step = i * n_tiles + j
    num_steps = n * n_tiles
    slot = step % 2

    def dma_triplet(bi, bj, sl):
        # interior rows + top/bottom halo rows (source clamped in-bounds; edge
        # rows are zeroed after the wait so clamped data never leaks into taps).
        base = bi * h + bj * tr
        top = jnp.maximum(base - 1, 0)
        bot = jnp.minimum(base + tr, n * h - 1)
        return (
            pltpu.make_async_copy(x_hbm.at[pl.ds(base, tr)],
                                  xbuf.at[sl, pl.ds(1, tr), pl.ds(1, w)],
                                  sem.at[sl, 0]),
            pltpu.make_async_copy(x_hbm.at[pl.ds(top, 1)],
                                  xbuf.at[sl, pl.ds(0, 1), pl.ds(1, w)],
                                  sem.at[sl, 1]),
            pltpu.make_async_copy(x_hbm.at[pl.ds(bot, 1)],
                                  xbuf.at[sl, pl.ds(tr + 1, 1), pl.ds(1, w)],
                                  sem.at[sl, 2]),
        )

    @pl.when(step == 0)
    def _():
        # One-time zero of both slots: the halo columns (0 and w+1) are never
        # touched by any DMA and must read as zeros (left/right padding).
        xbuf[...] = jnp.zeros(xbuf.shape, xbuf.dtype)
        for cp in dma_triplet(i, j, slot):
            cp.start()

    # wait for this tile's halo window (issued by the previous step's prefetch)
    for cp in dma_triplet(i, j, slot):
        cp.wait()

    # prefetch the next grid step's window into the other slot (double buffer)
    @pl.when(step + 1 < num_steps)
    def _():
        nstep = step + 1
        ni = nstep // n_tiles
        nj = nstep % n_tiles
        for cp in dma_triplet(ni, nj, 1 - slot):
            cp.start()

    # zero the top/bottom padding rows at image edges (the clamped halo DMAs put
    # neighbouring-image rows there).
    zero_row = jnp.zeros((1, wp, ctot), xbuf.dtype)

    @pl.when(j == 0)
    def _():
        xbuf[slot, pl.ds(0, 1)] = zero_row

    @pl.when(j == n_tiles - 1)
    def _():
        xbuf[slot, pl.ds(tr + 1, 1)] = zero_row

    xv = xbuf[slot]                                    # (tr+2, w+2, ctot) bf16
    for (c0, cin, relu), w_ref, s_ref, b_ref, o_ref in zip(
            branch_cfg, w_refs, s_refs, b_refs, o_refs):
        # Wide-K LHS: all 9 taps concatenated along K -> a single MXU matmul
        # per branch (instead of 9 short-K dots with an accumulator chain).
        patches = [xv[dy:dy + tr, dx:dx + w, c0:c0 + cin]
                   for dy in range(3) for dx in range(3)]
        lhs = jnp.concatenate(patches, axis=-1).reshape(tr * w, 9 * cin)
        y = jnp.dot(lhs, w_ref[...], preferred_element_type=jnp.float32)
        y = y * s_ref[...] + b_ref[...]
        if relu:
            y = jnp.maximum(y, 0.0)
        o_ref[...] = y.astype(o_ref.dtype)


def grouped_conv3x3(x_rows, n, h, w, branches):
    """Fused grouped 3x3 convs (stride 1, pad 1) sharing one halo DMA.

    x_rows:   (n*h, w, ctot) bf16 activations in HBM (unpadded).
    branches: sequence of dicts {c0, cin, w: (9*cin, cout) bf16,
              scale/bias: (1, cout) f32, relu: bool}.
    Returns a tuple of (n*h*w, cout_i) bf16 outputs.
    """
    ctot = x_rows.shape[-1]
    nb = len(branches)
    tr = _pick_row_tile(h, w, ctot)
    n_tiles = h // tr
    rows_in = tr + 2
    m_out = n * h * w

    kernel = functools.partial(
        _gconv3x3_kernel, nb=nb, n=n, h=h, w=w, tr=tr, n_tiles=n_tiles,
        branch_cfg=tuple((br["c0"], br["cin"], br["relu"]) for br in branches))

    in_specs = [pl.BlockSpec(memory_space=pl.ANY)]          # raw HBM activation
    operands = [x_rows]
    for br in branches:
        in_specs.append(pl.BlockSpec(tuple(br["w"].shape), lambda i, j: (0, 0)))
        operands.append(br["w"])
    for br in branches:
        in_specs.append(pl.BlockSpec(tuple(br["scale"].shape), lambda i, j: (0, 0)))
        operands.append(br["scale"])
    for br in branches:
        in_specs.append(pl.BlockSpec(tuple(br["bias"].shape), lambda i, j: (0, 0)))
        operands.append(br["bias"])

    out_shape = tuple(jax.ShapeDtypeStruct((m_out, br["w"].shape[-1]), jnp.bfloat16)
                      for br in branches)
    out_specs = tuple(
        pl.BlockSpec((tr * w, br["w"].shape[-1]),
                     lambda i, j, _nt=n_tiles: (i * _nt + j, 0))
        for br in branches)

    outs = pl.pallas_call(
        kernel,
        out_shape=out_shape,
        grid=(n, n_tiles),
        in_specs=in_specs,
        out_specs=out_specs,
        scratch_shapes=[pltpu.VMEM((2, rows_in, w + 2, ctot), jnp.bfloat16),
                        pltpu.SemaphoreType.DMA((2, 3))],
        compiler_params=pltpu.CompilerParams(
            # the cross-step double-buffered halo DMA requires in-order grid steps
            # TODO(synk): per-core batch split for v7x megacore once DMA-bound lifts.
            dimension_semantics=("arbitrary", "arbitrary"),
            vmem_limit_bytes=_vmem_limit_bytes()),
    )(*operands)
    return tuple(outs) if isinstance(outs, (tuple, list)) else (outs,)


# ------------- concat-free 1x1 conv + BN + fused SE pool/gate -------------

def _dual_mm_bn_pool_gate_kernel(x1_ref, x2_ref, w1_ref, w2_ref, s_ref, b_ref,
                                 fc1w_ref, fc1b_ref, fc2w_ref, fc2b_ref,
                                 o_ref, g_ref, acc_ref, *, inv_hw):
    # y = (x1 @ w1 + x2 @ w2) * scale + bias  == (concat(x1,x2) @ W) * s + b,
    # with the SE global-avg-pool accumulated in VMEM scratch and the tiny
    # fc1/relu/fc2/sigmoid gate evaluated once per image at the last tile.
    s_idx = pl.program_id(1)
    y = jnp.dot(x1_ref[0], w1_ref[...], preferred_element_type=jnp.float32)
    y = y + jnp.dot(x2_ref[0], w2_ref[...], preferred_element_type=jnp.float32)
    y = y * s_ref[...] + b_ref[...]
    o_ref[0] = y.astype(o_ref.dtype)

    @pl.when(s_idx == 0)
    def _():
        acc_ref[...] = jnp.zeros_like(acc_ref)

    acc_ref[...] += jnp.sum(y, axis=0, keepdims=True)

    @pl.when(s_idx == pl.num_programs(1) - 1)
    def _():
        pooled = acc_ref[...] * inv_hw                                  # (1, p4)
        h1 = jnp.maximum(
            jnp.dot(pooled, fc1w_ref[...], preferred_element_type=jnp.float32)
            + fc1b_ref[...], 0.0)
        g = jnp.dot(h1, fc2w_ref[...],
                    preferred_element_type=jnp.float32) + fc2b_ref[...]
        g_ref[0] = 1.0 / (1.0 + jnp.exp(-g))                            # sigmoid


def dual_conv1x1_bn_se_pool(x1, x2, w1, w2, scale, bias,
                            fc1_w, fc1_b, fc2_w, fc2_b):
    n, hw, c1 = x1.shape
    c2 = x2.shape[-1]
    cout = w1.shape[-1]
    cr = fc1_w.shape[-1]
    t_hw = _divisor_tile(hw, 2048)
    out, gate = pl.pallas_call(
        functools.partial(_dual_mm_bn_pool_gate_kernel, inv_hw=1.0 / hw),
        out_shape=(jax.ShapeDtypeStruct((n, hw, cout), jnp.float32),
                   jax.ShapeDtypeStruct((n, 1, cout), jnp.float32)),
        grid=(n, hw // t_hw),
        in_specs=[
            pl.BlockSpec((1, t_hw, c1), lambda i, s: (i, s, 0)),
            pl.BlockSpec((1, t_hw, c2), lambda i, s: (i, s, 0)),
            pl.BlockSpec((c1, cout), lambda i, s: (0, 0)),
            pl.BlockSpec((c2, cout), lambda i, s: (0, 0)),
            pl.BlockSpec((1, cout), lambda i, s: (0, 0)),
            pl.BlockSpec((1, cout), lambda i, s: (0, 0)),
            pl.BlockSpec((cout, cr), lambda i, s: (0, 0)),
            pl.BlockSpec((1, cr), lambda i, s: (0, 0)),
            pl.BlockSpec((cr, cout), lambda i, s: (0, 0)),
            pl.BlockSpec((1, cout), lambda i, s: (0, 0)),
        ],
        out_specs=(pl.BlockSpec((1, t_hw, cout), lambda i, s: (i, s, 0)),
                   pl.BlockSpec((1, 1, cout), lambda i, s: (i, 0, 0))),
        scratch_shapes=[pltpu.VMEM((1, cout), jnp.float32)],
        compiler_params=pltpu.CompilerParams(
            dimension_semantics=("parallel", "arbitrary"),
            vmem_limit_bytes=_vmem_limit_bytes()),
    )(x1, x2, w1, w2, scale, bias, fc1_w, fc1_b, fc2_w, fc2_b)
    return out, gate


# ----------------- SE scale + residual add + ReLU (tiled) ------------------

def _se_apply_kernel(x_ref, r_ref, g_ref, o_ref):
    y = x_ref[...] * g_ref[...] + r_ref[...]
    o_ref[...] = jnp.maximum(y, 0.0).astype(o_ref.dtype)


def se_apply_residual_relu(out3d, res3d, gate):
    n, hw, c = out3d.shape
    t_hw = _divisor_tile(hw, 2048)
    # TODO(synk): cout (=planes*4) < 128 here -> masked partial stores; pad/fuse
    # to a lane-dense last dim for configs where it matters.
    return pl.pallas_call(
        _se_apply_kernel,
        out_shape=jax.ShapeDtypeStruct((n, hw, c), jnp.float32),
        grid=(n, hw // t_hw),
        in_specs=[
            pl.BlockSpec((1, t_hw, c), lambda i, s: (i, s, 0)),
            pl.BlockSpec((1, t_hw, c), lambda i, s: (i, s, 0)),
            pl.BlockSpec((1, 1, c), lambda i, s: (i, 0, 0)),
        ],
        out_specs=pl.BlockSpec((1, t_hw, c), lambda i, s: (i, s, 0)),
        compiler_params=pltpu.CompilerParams(
            dimension_semantics=("parallel", "parallel"),
            vmem_limit_bytes=_vmem_limit_bytes()),
    )(out3d, res3d, gate)


# ------------------------------ module wrapper ------------------------------

class SEAIRXBottleneckPallas:
    """Pallas port of SEAIRXBottleneck (inference-mode BN, downsample=None)."""
    expansion = 4

    def __init__(self, key, inplanes, planes, baseWidth, cardinality, stride=1):
        D = int(math.floor(planes * (baseWidth / 64.0)))
        C = cardinality
        dc, dch = D * C, (D * C) // 2
        p4, pr = planes * 4, planes // 4
        g2 = C // 2
        cg2 = dch // g2
        self.stride = stride
        self.inplanes = inplanes
        self.groups1, self.groups2 = C, g2
        self.dc, self.dch, self.p4 = dc, dch, p4

        keys = iter(jax.random.split(key, 32))

        def w(shape, scale=0.1):
            return scale * jax.random.normal(next(keys), shape, jnp.float32)

        def bn_params(c):
            gamma = 1.0 + 0.1 * jax.random.normal(next(keys), (c,), jnp.float32)
            beta = 0.1 * jax.random.normal(next(keys), (c,), jnp.float32)
            mean = 0.1 * jax.random.normal(next(keys), (c,), jnp.float32)
            var = 0.5 + jnp.abs(0.3 * jax.random.normal(next(keys), (c,), jnp.float32))
            return fold_bn(gamma, beta, mean, var)

        # f32 "module parameters" (also consumed by the pure-JAX reference)
        self.w1_1 = w((inplanes, dc))
        self.s1_1, self.b1_1 = bn_params(dc)
        self.w1_2 = w((3, 3, C, D, D))
        self.w2_1 = w((inplanes, dch))
        self.s2_1, self.b2_1 = bn_params(dch)
        self.w2_2 = w((3, 3, g2, cg2, cg2))
        self.s2_2, self.b2_2 = bn_params(dch)
        self.w2_3 = w((3, 3, g2, cg2, cg2))
        self.s_cat, self.b_cat = bn_params(dc + dch)
        self.w_conv = w((dc + dch, p4))
        self.s_bn, self.b_bn = bn_params(p4)
        self.fc1_w = w((p4, pr))
        self.fc1_b = w((1, pr))
        self.fc2_w = w((pr, p4))
        self.fc2_b = w((1, p4))

        # ---- kernel-side precomputed operands (bf16 matmul weights) ----
        self.w_head = jnp.concatenate([self.w1_1, self.w2_1], axis=1).astype(jnp.bfloat16)
        self.s_head = jnp.concatenate([self.s1_1, self.s2_1], axis=1)
        self.b_head = jnp.concatenate([self.b1_1, self.b2_1], axis=1)
        self.w1_2_mat = _taps_to_matrix(self.w1_2).astype(jnp.bfloat16)   # (9*dc, dc)
        self.w2_2_mat = _taps_to_matrix(self.w2_2).astype(jnp.bfloat16)   # (9*dch, dch)
        self.w2_3_mat = _taps_to_matrix(self.w2_3).astype(jnp.bfloat16)   # (9*dch, dch)
        self.w_conv1 = self.w_conv[:dc].astype(jnp.bfloat16)
        self.w_conv2 = self.w_conv[dc:].astype(jnp.bfloat16)
        # TODO(synk): downsample branch / stride>1 not implemented; module is
        # exercised with downsample=None (requires stride==1, inplanes==planes*4).

    def __call__(self, x_nchw):
        n, cin, h, wd = x_nchw.shape
        assert self.stride == 1 and cin == self.p4, (
            "downsample=None requires stride==1 and inplanes == planes*4")
        x_nhwc = jnp.transpose(x_nchw, (0, 2, 3, 1)).astype(jnp.float32)
        x2d = x_nhwc.reshape(n * h * wd, cin)

        dc, dch, p4 = self.dc, self.dch, self.p4
        ctot = dc + dch

        # fused branch heads: one (M, cin) @ (cin, dc+dch) matmul + BN + ReLU, bf16 out
        head = conv1x1_bn_relu(x2d, self.w_head, self.s_head, self.b_head)
        head_rows = head.reshape(n * h, wd, ctot)

        # branch-1 grouped conv (+ bn_concat[:dc] + relu) and branch-2 stage-1
        # grouped conv (+ bn2_2 + relu): one pallas_call, one shared halo DMA.
        b1, b2 = grouped_conv3x3(
            head_rows, n, h, wd,
            branches=(
                dict(c0=0, cin=dc, w=self.w1_2_mat,
                     scale=self.s_cat[:, :dc], bias=self.b_cat[:, :dc], relu=True),
                dict(c0=dc, cin=dch, w=self.w2_2_mat,
                     scale=self.s2_2, bias=self.b2_2, relu=True),
            ))

        # branch-2 stage-2 grouped conv (+ bn_concat[dc:] + relu)
        (b2,) = grouped_conv3x3(
            b2.reshape(n * h, wd, dch), n, h, wd,
            branches=(dict(c0=0, cin=dch, w=self.w2_3_mat,
                           scale=self.s_cat[:, dc:], bias=self.b_cat[:, dc:],
                           relu=True),))

        # "concat -> conv -> bn" without materializing the concat, with the SE
        # global-avg-pool + fc gate fused into its epilogue.
        out3d, gate = dual_conv1x1_bn_se_pool(
            b1.reshape(n, h * wd, dc), b2.reshape(n, h * wd, dch),
            self.w_conv1, self.w_conv2, self.s_bn, self.b_bn,
            self.fc1_w, self.fc1_b, self.fc2_w, self.fc2_b)

        # out = relu(out * gate + residual)
        res3d = x_nhwc.reshape(n, h * wd, cin)   # downsample is None
        y3d = se_apply_residual_relu(out3d, res3d, gate)
        return jnp.transpose(y3d.reshape(n, h, wd, p4), (0, 3, 1, 2))


# ------------------------------ pure-JAX reference ------------------------------

def ref_forward(mod, x_nchw):
    # Matches the Pallas path's numerics: matmul/conv inputs rounded to bf16,
    # accumulation + BN/ReLU epilogues in f32.
    x = jnp.transpose(x_nchw, (0, 2, 3, 1)).astype(jnp.float32)
    relu = lambda t: jnp.maximum(t, 0.0)
    bf = lambda t: t.astype(jnp.bfloat16)

    def conv1x1(t, w):
        return jnp.einsum('nhwc,cd->nhwd', bf(t), bf(w),
                          preferred_element_type=jnp.float32)

    def gconv(t, w5, stride, groups):
        kh, kw, g, cig, cog = w5.shape
        whwio = jnp.transpose(w5, (0, 1, 3, 2, 4)).reshape(kh, kw, cig, g * cog)
        return lax.conv_general_dilated(
            bf(t), bf(whwio), (stride, stride), ((1, 1), (1, 1)),
            dimension_numbers=('NHWC', 'HWIO', 'NHWC'),
            feature_group_count=groups,
            preferred_element_type=jnp.float32)

    b1 = relu(conv1x1(x, mod.w1_1) * mod.s1_1 + mod.b1_1)
    b1 = gconv(b1, mod.w1_2, mod.stride, mod.groups1)
    b2 = relu(conv1x1(x, mod.w2_1) * mod.s2_1 + mod.b2_1)
    b2 = relu(gconv(b2, mod.w2_2, mod.stride, mod.groups2) * mod.s2_2 + mod.b2_2)
    b2 = gconv(b2, mod.w2_3, 1, mod.groups2)
    cat = jnp.concatenate([b1, b2], axis=-1)
    out = relu(cat * mod.s_cat + mod.b_cat)
    out = conv1x1(out, mod.w_conv) * mod.s_bn + mod.b_bn
    pooled = jnp.mean(out, axis=(1, 2))
    s = relu(pooled @ mod.fc1_w + mod.fc1_b)
    s = jax.nn.sigmoid(s @ mod.fc2_w + mod.fc2_b)
    out = relu(out * s[:, None, None, :] + x)
    return jnp.transpose(out, (0, 3, 1, 2))


if __name__ == "__main__":
    key = jax.random.PRNGKey(0)
    k_x, k_p = jax.random.split(key)

    inplanes, planes, baseWidth, cardinality = 32, 8, 64, 4   # D=8, C=4
    N, H, W = 2, 8, 8
    x = jax.random.normal(k_x, (N, inplanes, H, W), jnp.float32)

    mod = SEAIRXBottleneckPallas(k_p, inplanes, planes, baseWidth, cardinality, stride=1)

    out = jax.block_until_ready(mod(x))
    assert out.shape == (N, planes * 4, H, W), out.shape

    ref = jax.block_until_ready(ref_forward(mod, x))
    max_err = float(jnp.max(jnp.abs(out - ref)))
    assert max_err < 2e-2, f"mismatch vs reference: max abs err = {max_err}"

    print("KERNEL_OK")
</pallas_src>

<mosaic_0001>
module attributes {stable_mosaic.version = 11 : i64} {
  func.func @_mm_bn_relu_kernel(%arg0: i32, %arg1: memref<128x32xf32, #tpu.memory_space<vmem>>, %arg2: memref<32x48xbf16, #tpu.memory_space<vmem>>, %arg3: memref<1x48xf32, #tpu.memory_space<vmem>>, %arg4: memref<1x48xf32, #tpu.memory_space<vmem>>, %arg5: memref<128x48xbf16, #tpu.memory_space<vmem>>) attributes {dimension_semantics = [#tpu.dimension_semantics<parallel>], iteration_bounds = array<i64: 1>, scalar_prefetch = 0 : i64, scratch_operands = 0 : i64, tpu.core_type = #tpu.core_type<tc>, window_params = [{transform_indices = @transform_0, window_bounds = array<i64: 128, 32>}, {pipeline_mode = #tpu.pipeline_mode<synchronous>, transform_indices = @transform_1, window_bounds = array<i64: 32, 48>}, {pipeline_mode = #tpu.pipeline_mode<synchronous>, transform_indices = @transform_2, window_bounds = array<i64: 1, 48>}, {pipeline_mode = #tpu.pipeline_mode<synchronous>, transform_indices = @transform_3, window_bounds = array<i64: 1, 48>}, {transform_indices = @transform_4, window_bounds = array<i64: 128, 48>}]} {
    %c0 = arith.constant 0 : index
    %c0_0 = arith.constant 0 : index
    %0 = vector.load %arg1[%c0, %c0_0] : memref<128x32xf32, #tpu.memory_space<vmem>>, vector<128x32xf32>
    %1 = arith.truncf %0 : vector<128x32xf32> to vector<128x32xbf16>
    %c0_1 = arith.constant 0 : index
    %c0_2 = arith.constant 0 : index
    %2 = vector.load %arg2[%c0_1, %c0_2] : memref<32x48xbf16, #tpu.memory_space<vmem>>, vector<32x48xbf16>
    %cst = arith.constant dense<0.000000e+00> : vector<128x48xf32>
    %3 = tpu.matmul %1, %2, %cst {dimension_numbers = #tpu.dot_dimension_numbers<[1], [0], [0], [1], [0, 0, 1, 1], [], []>} : vector<128x32xbf16>, vector<32x48xbf16>, vector<128x48xf32> -> vector<128x48xf32>
    %c0_3 = arith.constant 0 : index
    %c0_4 = arith.constant 0 : index
    %4 = vector.load %arg3[%c0_3, %c0_4] : memref<1x48xf32, #tpu.memory_space<vmem>>, vector<1x48xf32>
    %5 = vector.broadcast %4 : vector<1x48xf32> to vector<128x48xf32>
    %6 = arith.mulf %3, %5 : vector<128x48xf32>
    %c0_5 = arith.constant 0 : index
    %c0_6 = arith.constant 0 : index
    %7 = vector.load %arg4[%c0_5, %c0_6] : memref<1x48xf32, #tpu.memory_space<vmem>>, vector<1x48xf32>
    %8 = vector.broadcast %7 : vector<1x48xf32> to vector<128x48xf32>
    %9 = arith.addf %6, %8 : vector<128x48xf32>
    %cst_7 = arith.constant 0.000000e+00 : f32
    %10 = vector.broadcast %cst_7 : f32 to vector<128x48xf32>
    %11 = arith.maximumf %9, %10 : vector<128x48xf32>
    %12 = arith.truncf %11 : vector<128x48xf32> to vector<128x48xbf16>
    %c0_8 = arith.constant 0 : index
    %c0_9 = arith.constant 0 : index
    %13 = vector.load %arg5[%c0_8, %c0_9] : memref<128x48xbf16, #tpu.memory_space<vmem>>, vector<128x48xbf16>
    tpu.vector_store %arg5[%c0_8, %c0_9], %12 {strides = array<i32>} : memref<128x48xbf16, #tpu.memory_space<vmem>>, vector<128x48xbf16>,
    return
  }
  func.func @transform_0(%arg0: i32) -> (i32, i32) {
    %c0_i32 = arith.constant 0 : i32
    %c0_i32_0 = arith.constant 0 : i32
    return %arg0, %c0_i32 : i32, i32
  }
  func.func @transform_1(%arg0: i32) -> (i32, i32) {
    %c0_i32 = arith.constant 0 : i32
    %c0_i32_0 = arith.constant 0 : i32
    %c0_i32_1 = arith.constant 0 : i32
    return %c0_i32, %c0_i32_0 : i32, i32
  }
  func.func @transform_2(%arg0: i32) -> (i32, i32) {
    %c0_i32 = arith.constant 0 : i32
    %c0_i32_0 = arith.constant 0 : i32
    %c0_i32_1 = arith.constant 0 : i32
    return %c0_i32, %c0_i32_0 : i32, i32
  }
  func.func @transform_3(%arg0: i32) -> (i32, i32) {
    %c0_i32 = arith.constant 0 : i32
    %c0_i32_0 = arith.constant 0 : i32
    %c0_i32_1 = arith.constant 0 : i32
    return %c0_i32, %c0_i32_0 : i32, i32
  }
  func.func @transform_4(%arg0: i32) -> (i32, i32) {
    %c0_i32 = arith.constant 0 : i32
    %c0_i32_0 = arith.constant 0 : i32
    return %arg0, %c0_i32 : i32, i32
  }
}

</mosaic_0001>

<llo_original>
// kernel: tpu_custom_call.1
$region0: #{tpu_custom_call.1}
  #allocation0 [shape = 'u32[]', space=smem, size = 0x4, offset = 0x4, fixed_abs, tag = 'smem constant byte address 0x4 - core index']
  #allocation1 [shape = 'u32[144,128]{1,0:T(1,128)}', space=vmem, size = 0x12000, scoped, tag = 'internal scratch']
  %s0 = inlined_call_operand.vmem [shape: f32[128,32], index: 0, kind: input, shape index: {}]
  %s1 = inlined_call_operand.vmem [shape: bf16[32,48], index: 1, kind: input, shape index: {}]
  %s2 = inlined_call_operand.vmem [shape: f32[1,48], index: 2, kind: input, shape index: {}]
  %s3 = inlined_call_operand.vmem [shape: f32[1,48], index: 3, kind: input, shape index: {}]
  %s4 = inlined_call_operand.vmem [shape: bf16[128,48], index: 4, kind: output, shape index: {}]
  %s5 = sld [smem:[#allocation0]]
  $region26: #{tpu_custom_call.1} parent=0
    _
  %s7 = ssub.s32 1, %s5
  %s8 = scalar_select 0, %s7, %s5
  // Predicated region
  $region2: #{tpu_custom_call.1} parent=0 // pred_check
    _
  $region3: #{tpu_custom_call.1} parent=0 // pred_check_branch
    %10 = sbr.rel (0) target = $region5
  $region4: #{tpu_custom_call.1} parent=0 // pred_region
    _
  $region5: #{tpu_custom_call.1} parent=0 // pred_fallthru
    _
  // Predicated region
  $region6: #{tpu_custom_call.1} parent=0 // pred_check
    _
  $region7: #{tpu_custom_call.1} parent=0 // pred_check_branch
    %12 = sbr.rel (0) target = $region9
  $region8: #{tpu_custom_call.1} parent=0 // pred_region
    _
  $region9: #{tpu_custom_call.1} parent=0 // pred_fallthru
    _
  // Predicated region
  $region10: #{tpu_custom_call.1} parent=0 // pred_check
    _
  $region11: #{tpu_custom_call.1} parent=0 // pred_check_branch
    %14 = sbr.rel (0) target = $region13
  $region12: #{tpu_custom_call.1} parent=0 // pred_region
    _
  $region13: #{tpu_custom_call.1} parent=0 // pred_fallthru
    _
  // Predicated region
  $region14: #{tpu_custom_call.1} parent=0 // pred_check
    _
  $region15: #{tpu_custom_call.1} parent=0 // pred_check_branch
    %16 = sbr.rel (0) target = $region17
  $region16: #{tpu_custom_call.1} parent=0 // pred_region
    _
  $region17: #{tpu_custom_call.1} parent=0 // pred_fallthru
    _
  %v18 = vld [vmem:[%s0] sm:$0xff]
  %v19 = vld [vmem:[%s0 + $0x8] sm:$0xff]
  %v20 = vld [vmem:[%s0 + $0x10] sm:$0xff]
  %v21 = vld [vmem:[%s0 + $0x18] sm:$0xff]
  %v22 = vld [vmem:[%s0 + $0x20] sm:$0xff]
  %v23 = vld [vmem:[%s0 + $0x28] sm:$0xff]
  %v24 = vld [vmem:[%s0 + $0x30] sm:$0xff]
  %v25 = vld [vmem:[%s0 + $0x38] sm:$0xff]
  %v26 = vld [vmem:[%s0 + $0x40] sm:$0xff]
  %v27 = vld [vmem:[%s0 + $0x48] sm:$0xff]
  %v28 = vld [vmem:[%s0 + $0x50] sm:$0xff]
  %v29 = vld [vmem:[%s0 + $0x58] sm:$0xff]
  %v30 = vld [vmem:[%s0 + $0x60] sm:$0xff]
  %v31 = vld [vmem:[%s0 + $0x68] sm:$0xff]
  %v32 = vld [vmem:[%s0 + $0x70] sm:$0xff]
  %v33 = vld [vmem:[%s0 + $0x78] sm:$0xff]
  %v34 = vpack.c.bf16 %v19, %v18
  %v35 = vpack.c.bf16 %v21, %v20
  %v36 = vpack.c.bf16 %v23, %v22
  %v37 = vpack.c.bf16 %v25, %v24
  %v38 = vpack.c.bf16 %v27, %v26
  %v39 = vpack.c.bf16 %v29, %v28
  %v40 = vpack.c.bf16 %v31, %v30
  %v41 = vpack.c.bf16 %v33, %v32
  %v42 = vld [vmem:[%s1] sm:$0xf]
  %v43 = vld [vmem:[%s1 + $0x4] sm:$0xf]
  %v44 = vld [vmem:[%s1 + $0x8] sm:$0xf]
  %v45 = vld [vmem:[%s1 + $0xc] sm:$0xf]
  %v50 = vunpack.c.l.b16 %v42
  %v51 = vunpack.c.l.b16 %v43
  %v52 = vunpack.c.l.b16 %v44
  %v53 = vunpack.c.l.b16 %v45
  %v54 = vpack.c.b16 %v51, %v50
  %v55 = vpack.c.b16 %v53, %v52
  %vm58 = vcmask 261120
  %v60 = vsel %vm58, %v34, 0
  %v63 = vsel %vm58, %v35, 0
  %v66 = vsel %vm58, %v36, 0
  %v69 = vsel %vm58, %v37, 0
  %v72 = vsel %vm58, %v38, 0
  %v75 = vsel %vm58, %v39, 0
  %v78 = vsel %vm58, %v40, 0
  %v81 = vsel %vm58, %v41, 0
  %83 = vmatprep.subr.bf16.mxu0 0
  %84 = vmatpush1.bf16.msra.mxu0 %v54
  %85 = vmatprep.subr.bf16.mxu0 0
  %86 = vmatpush1.bf16.msra.mxu0 %v55
  %87 = vmatprep.subr.bf16.mxu0 0
  %88 = vmatpush1.bf16.msra.mxu0 0
  %89 = vmatprep.subr.bf16.mxu0 0
  %90 = vmatpush1.bf16.msra.mxu0 0
  %91 = vmatprep.subr.bf16.mxu0 0
  %92 = vmatpush1.bf16.msra.mxu0 0
  %93 = vmatprep.subr.bf16.mxu0 0
  %94 = vmatpush1.bf16.msra.mxu0 0
  %95 = vmatprep.subr.bf16.mxu0 0
  %96 = vmatpush1.bf16.msra.mxu0 0
  %97 = vmatprep.subr.bf16.mxu0 0
  %98 = vmatpush1.bf16.msra.mxu0 0
  %99 = vmatprep.subr.bf16.mxu0 0
  %100 = vmatpush1.bf16.msra.mxu0 0
  %101 = vmatprep.subr.bf16.mxu0 0
  %102 = vmatpush1.bf16.msra.mxu0 0
  %103 = vmatprep.subr.bf16.mxu0 0
  %104 = vmatpush1.bf16.msra.mxu0 0
  %105 = vmatprep.subr.bf16.mxu0 0
  %106 = vmatpush1.bf16.msra.mxu0 0
  %107 = vmatprep.subr.bf16.mxu0 0
  %108 = vmatpush1.bf16.msra.mxu0 0
  %109 = vmatprep.subr.bf16.mxu0 0
  %110 = vmatpush1.bf16.msra.mxu0 0
  %111 = vmatprep.subr.bf16.mxu0 0
  %112 = vmatpush1.bf16.msra.mxu0 0
  %113 = vmatprep.subr.bf16.mxu0 0
  %114 = vmatpush1.bf16.msra.mxu0 0
  %115 = vmatprep.mubr.bf16.mxu0 0
  %116 = vmatmul.mubr.bf16.gmra.mrb[0].mxu0 %v60
  %v117 = vpop.f32.mrb[0].mxu0
  %v118 = vadd.f32 0.0, %v117
  %v119 = vpop.f32.mrb[0].mxu0
  %v120 = vpop.f32.mrb[0].mxu0
  %v121 = vadd.f32 0.0, %v120
  %v122 = vpop.f32.mrb[0].mxu0
  %123 = vmatprep.mubr.bf16.mxu0 0
  %124 = vmatmul.mubr.bf16.gmra.mrb[0].mxu0 %v63
  %v125 = vpop.f32.mrb[0].mxu0
  %v126 = vadd.f32 0.0, %v125
  %v127 = vpop.f32.mrb[0].mxu0
  %v128 = vpop.f32.mrb[0].mxu0
  %v129 = vadd.f32 0.0, %v128
  %v130 = vpop.f32.mrb[0].mxu0
  %131 = vmatprep.mubr.bf16.mxu0 0
  %132 = vmatmul.mubr.bf16.gmra.mrb[0].mxu0 %v66
  %v133 = vpop.f32.mrb[0].mxu0
  %v134 = vadd.f32 0.0, %v133
  %v135 = vpop.f32.mrb[0].mxu0
  %v136 = vpop.f32.mrb[0].mxu0
  %v137 = vadd.f32 0.0, %v136
  %v138 = vpop.f32.mrb[0].mxu0
  %139 = vmatprep.mubr.bf16.mxu0 0
  %140 = vmatmul.mubr.bf16.gmra.mrb[0].mxu0 %v69
  %v141 = vpop.f32.mrb[0].mxu0
  %v142 = vadd.f32 0.0, %v141
  %v143 = vpop.f32.mrb[0].mxu0
  %v144 = vpop.f32.mrb[0].mxu0
  %v145 = vadd.f32 0.0, %v144
  %v146 = vpop.f32.mrb[0].mxu0
  %147 = vmatprep.mubr.bf16.mxu0 0
  %148 = vmatmul.mubr.bf16.gmra.mrb[0].mxu0 %v72
  %v149 = vpop.f32.mrb[0].mxu0
  %v150 = vadd.f32 0.0, %v149
  %v151 = vpop.f32.mrb[0].mxu0
  %v152 = vpop.f32.mrb[0].mxu0
  %v153 = vadd.f32 0.0, %v152
  %v154 = vpop.f32.mrb[0].mxu0
  %155 = vmatprep.mubr.bf16.mxu0 0
  %156 = vmatmul.mubr.bf16.gmra.mrb[0].mxu0 %v75
  %v157 = vpop.f32.mrb[0].mxu0
  %v158 = vadd.f32 0.0, %v157
  %v159 = vpop.f32.mrb[0].mxu0
  %v160 = vpop.f32.mrb[0].mxu0
  %v161 = vadd.f32 0.0, %v160
  %v162 = vpop.f32.mrb[0].mxu0
  %163 = vmatprep.mubr.bf16.mxu0 0
  %164 = vmatmul.mubr.bf16.gmra.mrb[0].mxu0 %v78
  %v165 = vpop.f32.mrb[0].mxu0
  %v166 = vadd.f32 0.0, %v165
  %v167 = vpop.f32.mrb[0].mxu0
  %v168 = vpop.f32.mrb[0].mxu0
  %v169 = vadd.f32 0.0, %v168
  %v170 = vpop.f32.mrb[0].mxu0
  %171 = vmatprep.mubr.bf16.mxu0 0
  %172 = vmatmul.mubr.bf16.gmra.mrb[0].mxu0 %v81
  %v173 = vpop.f32.mrb[0].mxu0
  %v174 = vadd.f32 0.0, %v173
  %v175 = vpop.f32.mrb[0].mxu0
  %v176 = vpop.f32.mrb[0].mxu0
  %v177 = vadd.f32 0.0, %v176
  %v178 = vpop.f32.mrb[0].mxu0
  %179 = vdwg.mxu0
  %v180 = vld [vmem:[%s2] sm:$0x1]
  %v182 = vlaneseq
  %v183 = vshrl.u32 %v182, 7
  %v184 = vsub.s32 0, %v183
  %v185 = vrot.slane %v180, %v184
  %v187 = vmul.f32 %v118, %v185
  %v188 = vmul.f32 %v121, %v185
  %v189 = vmul.f32 %v126, %v185
  %v190 = vmul.f32 %v129, %v185
  %v191 = vmul.f32 %v134, %v185
  %v192 = vmul.f32 %v137, %v185
  %v193 = vmul.f32 %v142, %v185
  %v194 = vmul.f32 %v145, %v185
  %v195 = vmul.f32 %v150, %v185
  %v196 = vmul.f32 %v153, %v185
  %v197 = vmul.f32 %v158, %v185
  %v198 = vmul.f32 %v161, %v185
  %v199 = vmul.f32 %v166, %v185
  %v200 = vmul.f32 %v169, %v185
  %v201 = vmul.f32 %v174, %v185
  %v202 = vmul.f32 %v177, %v185
  %v203 = vld [vmem:[%s3] sm:$0x1]
  %v205 = vlaneseq
  %v206 = vshrl.u32 %v205, 7
  %v207 = vsub.s32 0, %v206
  %v208 = vrot.slane %v203, %v207
  %v210 = vadd.f32 %v187, %v208
  %v211 = vadd.f32 %v188, %v208
  %v212 = vadd.f32 %v189, %v208
  %v213 = vadd.f32 %v190, %v208
  %v214 = vadd.f32 %v191, %v208
  %v215 = vadd.f32 %v192, %v208
  %v216 = vadd.f32 %v193, %v208
  %v217 = vadd.f32 %v194, %v208
  %v218 = vadd.f32 %v195, %v208
  %v219 = vadd.f32 %v196, %v208
  %v220 = vadd.f32 %v197, %v208
  %v221 = vadd.f32 %v198, %v208
  %v222 = vadd.f32 %v199, %v208
  %v223 = vadd.f32 %v200, %v208
  %v224 = vadd.f32 %v201, %v208
  %v225 = vadd.f32 %v202, %v208
  %v226 = vmax.f32 %v210, 0.0
  %v227 = vmax.f32 %v211, 0.0
  %v228 = vmax.f32 %v212, 0.0
  %v229 = vmax.f32 %v213, 0.0
  %v230 = vmax.f32 %v214, 0.0
  %v231 = vmax.f32 %v215, 0.0
  %v232 = vmax.f32 %v216, 0.0
  %v233 = vmax.f32 %v217, 0.0
  %v234 = vmax.f32 %v218, 0.0
  %v235 = vmax.f32 %v219, 0.0
  %v236 = vmax.f32 %v220, 0.0
  %v237 = vmax.f32 %v221, 0.0
  %v238 = vmax.f32 %v222, 0.0
  %v239 = vmax.f32 %v223, 0.0
  %v240 = vmax.f32 %v224, 0.0
  %v241 = vmax.f32 %v225, 0.0
  %v242 = vpack.c.bf16 %v227, %v226
  %v243 = vpack.c.bf16 %v229, %v228
  %v244 = vpack.c.bf16 %v231, %v230
  %v245 = vpack.c.bf16 %v233, %v232
  %v246 = vpack.c.bf16 %v235, %v234
  %v247 = vpack.c.bf16 %v237, %v236
  %v248 = vpack.c.bf16 %v239, %v238
  %v249 = vpack.c.bf16 %v241, %v240
  %v258 = vunpack.c.l.b16 %v242
  %v259 = vunpack.c.h.b16 %v242
  %v260 = vunpack.c.l.b16 %v243
  %v261 = vunpack.c.h.b16 %v243
  %v262 = vunpack.c.l.b16 %v244
  %v263 = vunpack.c.h.b16 %v244
  %v264 = vunpack.c.l.b16 %v245
  %v265 = vunpack.c.h.b16 %v245
  %v266 = vunpack.c.l.b16 %v246
  %v267 = vunpack.c.h.b16 %v246
  %v268 = vunpack.c.l.b16 %v247
  %v269 = vunpack.c.h.b16 %v247
  %v270 = vunpack.c.l.b16 %v248
  %v271 = vunpack.c.h.b16 %v248
  %v272 = vunpack.c.l.b16 %v249
  %v273 = vunpack.c.h.b16 %v249
  %v274 = vpack.c.b16 %v258, %v258
  %v275 = vpack.c.b16 %v259, %v259
  %v276 = vpack.c.b16 %v260, %v260
  %v277 = vpack.c.b16 %v261, %v261
  %v278 = vpack.c.b16 %v262, %v262
  %v279 = vpack.c.b16 %v263, %v263
  %v280 = vpack.c.b16 %v264, %v264
  %v281 = vpack.c.b16 %v265, %v265
  %v282 = vpack.c.b16 %v266, %v266
  %v283 = vpack.c.b16 %v267, %v267
  %v284 = vpack.c.b16 %v268, %v268
  %v285 = vpack.c.b16 %v269, %v269
  %v286 = vpack.c.b16 %v270, %v270
  %v287 = vpack.c.b16 %v271, %v271
  %v288 = vpack.c.b16 %v272, %v272
  %v289 = vpack.c.b16 %v273, %v273
  %vm306 = vcmask 388096
  %307 = vst.msk [vmem:[%s4] sm:$0xf] %vm306, %v274
  %308 = vst.msk [vmem:[%s4 + $0x4] sm:$0xf] %vm306, %v275
  %309 = vst.msk [vmem:[%s4 + $0x8] sm:$0xf] %vm306, %v276
  %310 = vst.msk [vmem:[%s4 + $0xc] sm:$0xf] %vm306, %v277
  %311 = vst.msk [vmem:[%s4 + $0x10] sm:$0xf] %vm306, %v278
  %312 = vst.msk [vmem:[%s4 + $0x14] sm:$0xf] %vm306, %v279
  %313 = vst.msk [vmem:[%s4 + $0x18] sm:$0xf] %vm306, %v280
  %314 = vst.msk [vmem:[%s4 + $0x1c] sm:$0xf] %vm306, %v281
  %315 = vst.msk [vmem:[%s4 + $0x20] sm:$0xf] %vm306, %v282
  %316 = vst.msk [vmem:[%s4 + $0x24] sm:$0xf] %vm306, %v283
  %317 = vst.msk [vmem:[%s4 + $0x28] sm:$0xf] %vm306, %v284
  %318 = vst.msk [vmem:[%s4 + $0x2c] sm:$0xf] %vm306, %v285
  %319 = vst.msk [vmem:[%s4 + $0x30] sm:$0xf] %vm306, %v286
  %320 = vst.msk [vmem:[%s4 + $0x34] sm:$0xf] %vm306, %v287
  %321 = vst.msk [vmem:[%s4 + $0x38] sm:$0xf] %vm306, %v288
  %322 = vst.msk [vmem:[%s4 + $0x3c] sm:$0xf] %vm306, %v289
  // Predicated region
  $region18: #{tpu_custom_call.1} parent=0 // pred_check
    _
  $region19: #{tpu_custom_call.1} parent=0 // pred_check_branch
    %324 = sbr.rel (0) target = $region21
  $region20: #{tpu_custom_call.1} parent=0 // pred_region
    _
  $region21: #{tpu_custom_call.1} parent=0 // pred_fallthru
    _
  // Predicated region
  $region22: #{tpu_custom_call.1} parent=0 // pred_check
    _
  $region23: #{tpu_custom_call.1} parent=0 // pred_check_branch
    %326 = sbr.rel (0) target = $region25
  $region24: #{tpu_custom_call.1} parent=0 // pred_region
    _
  $region25: #{tpu_custom_call.1} parent=0 // pred_fallthru
    _

</llo_original>
